<compile_context>
chip_gen: v6e
topology: v6e:2x2x1
jax: 0.10.0
libtpu: 0.0.40
codegen_flags: <defaults>
</compile_context>

<pallas_src>
import functools
import math

import jax
import jax.numpy as jnp
from jax.experimental import pallas as pl
from jax.experimental.pallas import tpu as pltpu


# ---------------------------------------------------------------------------
# Generation-aware tiling helpers.
# ---------------------------------------------------------------------------

def _tpu_vmem_capacity_bytes() -> int:
    """Physical VMEM of the current chip; conservative 64 MiB (v7x) fallback."""
    try:
        return int(pltpu.get_tpu_info().vmem_capacity_bytes)
    except Exception:
        return 64 << 20


def _choose_pixel_tile(hw: int, bytes_per_col: int, target_block_bytes: int,
                       *, batch: int = 1, min_grid_steps: int = 8) -> int:
    """Pick a lane-dense tile T along the flattened H*W axis.

    T is a multiple of 128 that divides H*W (StyleGAN spatial sizes are powers
    of two), capped so a pixel-tile's working set (`bytes_per_col` already
    includes the f32 intermediates) stays under `target_block_bytes`, then
    shrunk if needed so the grid has at least `min_grid_steps` steps (megacore
    load-balance on v7x).  If H*W is not a multiple of 128, fall back to the
    full extent (which also satisfies the (8, 128) block rule).
    """
    if hw % 128 != 0:
        return hw
    max_cols = max(128, (target_block_bytes // max(1, bytes_per_col)) // 128 * 128)
    t = 128
    while t * 2 <= max_cols and hw % (t * 2) == 0:
        t *= 2
    t = min(t, hw)
    # v7x megacore: keep enough grid points so both TensorCores get work.
    while t > 128 and batch * (hw // t) < min_grid_steps:
        t //= 2
    return t


def _vmem_limit_bytes(per_step_bytes: int, vmem_cap: int) -> int:
    """Explicit scoped-VMEM limit co-derived with the tile size.

    `per_step_bytes` already counts double-buffered IO plus f32 temporaries;
    add 50% headroom, floor at the 32 MiB default, cap at 75% of the physical
    VMEM of this chip generation (96 MiB on v5e/v6e, 48 MiB on v7x).
    """
    need = (3 * per_step_bytes) // 2
    cap = (vmem_cap * 3) // 4
    return int(min(cap, max(need, 32 << 20)))


# ---------------------------------------------------------------------------
# Kernel 1: EqualConv2d(1x1, no conv bias) + FusedLeakyReLU, fused epilogue.
# ---------------------------------------------------------------------------

def _conv1x1_flrelu_kernel(x_ref, w_ref, b_ref, o_ref, *,
                           weight_scale, negative_slope, act_gain, use_mxu):
    # x_ref : (1, C_in, T)   lane-dense pixel tile
    # w_ref : (C_out, C_in)  full (small) raw weight
    # b_ref : (C_out, 1)     FusedLeakyReLU bias
    # o_ref : (1, C_out, T)
    x = x_ref[0].astype(jnp.float32)                       # (C_in, T)
    # Fold the EqualConv2d scale into the small (C_out, C_in) weight once per
    # tile instead of scaling the full (C_out, T) accumulator.
    w = w_ref[...].astype(jnp.float32) * weight_scale      # (C_out, C_in)
    b = b_ref[...].astype(jnp.float32)                     # (C_out, 1)

    if use_mxu:
        # Wide channel mixing (ResBlock-skip-style 1x1s): use the MXU.
        acc = jnp.dot(w, x, preferred_element_type=jnp.float32)   # (C_out, T)
    else:
        # Tiny C_in (the encoder's first layer has C_in=3): unrolled VPU MAC
        # beats padding the MXU.
        c_in = x.shape[0]
        acc = w[:, 0:1] * x[0:1, :]                        # (C_out, T)
        for ci in range(1, c_in):
            acc = acc + w[:, ci:ci + 1] * x[ci:ci + 1, :]

    y = acc + b                                            # FusedLeakyReLU bias
    # leaky_relu(0.2) * sqrt(2), with the gain folded into the select so the
    # epilogue is one select + one vmul (both branch constants are trace-time).
    y = y * jnp.where(y >= 0.0, act_gain, negative_slope * act_gain)
    o_ref[...] = y[None].astype(o_ref.dtype)               # unmasked lane-dense store


def equal_conv1x1_fused_lrelu(x, weight, bias, *, negative_slope=0.2,
                              target_block_bytes=None, out_dtype=None):
    """ConvLayer(C_in, C_out, 1): EqualConv2d(1x1, no conv bias) + FusedLeakyReLU.

    x      : (N, C_in, H, W)
    weight : (C_out, C_in, 1, 1)  raw, unscaled (scale applied in-kernel)
    bias   : (C_out,)             FusedLeakyReLU bias
    out_dtype : optional narrower output dtype (e.g. bf16) if downstream layers
                accept it; accumulation/epilogue stay in f32.
    """
    N, C_in, H, W = x.shape
    C_out = weight.shape[0]
    HW = H * W
    out_dtype = x.dtype if out_dtype is None else out_dtype

    xf = x.reshape(N, C_in, HW)                     # lane-dense pixel axis
    w2 = weight.reshape(C_out, C_in)
    b2 = bias.reshape(C_out, 1)

    vmem_cap = _tpu_vmem_capacity_bytes()
    if target_block_bytes is None:
        # ~8 MiB blocks on 128 MiB VMEM (v5e/v6e), ~4 MiB on 64 MiB (v7x).
        target_block_bytes = max(2 << 20, vmem_cap // 16)

    in_item = jnp.dtype(x.dtype).itemsize
    out_item = jnp.dtype(out_dtype).itemsize
    # Per-pixel-column bytes INCLUDING the in-kernel f32 upcast/intermediates.
    bytes_per_col = C_in * (in_item + 4) + C_out * (out_item + 8)
    T = _choose_pixel_tile(HW, bytes_per_col, target_block_bytes, batch=N)
    grid = (N, HW // T)

    io_bytes = (C_in * in_item + C_out * out_item) * T          # per-step HBM tiles
    f32_bytes = (C_in + 2 * C_out) * T * 4                      # in-kernel temporaries
    per_step = 2 * io_bytes + f32_bytes + C_out * (C_in + 1) * 4

    kernel = functools.partial(
        _conv1x1_flrelu_kernel,
        weight_scale=1.0 / math.sqrt(C_in * 1 * 1),   # EqualConv2d, kernel_size=1
        negative_slope=negative_slope,
        act_gain=math.sqrt(2.0),
        use_mxu=(C_in >= 16),
    )
    out = pl.pallas_call(
        kernel,
        out_shape=jax.ShapeDtypeStruct((N, C_out, HW), out_dtype),
        grid=grid,
        in_specs=[
            pl.BlockSpec((1, C_in, T), lambda n, t: (n, 0, t)),
            pl.BlockSpec((C_out, C_in), lambda n, t: (0, 0)),
            pl.BlockSpec((C_out, 1), lambda n, t: (0, 0)),
        ],
        out_specs=pl.BlockSpec((1, C_out, T), lambda n, t: (n, 0, t)),
        compiler_params=pltpu.CompilerParams(
            dimension_semantics=("parallel", "parallel"),
            vmem_limit_bytes=_vmem_limit_bytes(per_step, vmem_cap),
        ),
    )(xf, w2, b2)
    return out.reshape(N, C_out, H, W)


# ---------------------------------------------------------------------------
# Kernel 2: PixelNorm (lane-dense, spatially tiled).
# ---------------------------------------------------------------------------

def _pixel_norm_kernel(x_ref, o_ref, *, inv_c):
    # x_ref / o_ref : (1, C, T) lane-dense pixel tile
    x = x_ref[...].astype(jnp.float32)
    mean_sq = jnp.sum(x * x, axis=1, keepdims=True) * inv_c   # sum * (1/C): no divide
    inv = jax.lax.rsqrt(mean_sq + 1e-8)                        # EUP slot
    o_ref[...] = (x * inv).astype(o_ref.dtype)                 # unmasked lane-dense store


def pixel_norm(x, *, target_block_bytes=None):
    """PixelNorm: x * rsqrt(mean(x**2, axis=1, keepdims=True) + 1e-8), NCHW."""
    N, C, H, W = x.shape
    HW = H * W
    xf = x.reshape(N, C, HW)                        # lane-dense pixel axis

    vmem_cap = _tpu_vmem_capacity_bytes()
    if target_block_bytes is None:
        target_block_bytes = max(2 << 20, vmem_cap // 16)

    itemsize = jnp.dtype(x.dtype).itemsize
    bytes_per_col = 2 * C * (itemsize + 4)          # in+out tiles plus f32 temps
    T = _choose_pixel_tile(HW, bytes_per_col, target_block_bytes, batch=N)
    grid = (N, HW // T)

    io_bytes = 2 * C * T * itemsize
    f32_bytes = 2 * C * T * 4
    per_step = 2 * io_bytes + f32_bytes

    out = pl.pallas_call(
        functools.partial(_pixel_norm_kernel, inv_c=1.0 / C),
        out_shape=jax.ShapeDtypeStruct((N, C, HW), x.dtype),
        grid=grid,
        in_specs=[pl.BlockSpec((1, C, T), lambda n, t: (n, 0, t))],
        out_specs=pl.BlockSpec((1, C, T), lambda n, t: (n, 0, t)),
        compiler_params=pltpu.CompilerParams(
            dimension_semantics=("parallel", "parallel"),
            vmem_limit_bytes=_vmem_limit_bytes(per_step, vmem_cap),
        ),
    )(xf)
    return out.reshape(N, C, H, W)


# ---------------------------------------------------------------------------
# Pure-JAX references.
# ---------------------------------------------------------------------------

def conv1x1_fused_lrelu_ref(x, weight, bias, negative_slope=0.2):
    C_out, C_in = weight.shape[0], weight.shape[1]
    w = weight.reshape(C_out, C_in) * (1.0 / math.sqrt(C_in))
    y = jnp.einsum("oc,nchw->nohw", w, x)
    y = y + bias.reshape(1, C_out, 1, 1)
    return jnp.where(y >= 0.0, y, y * negative_slope) * math.sqrt(2.0)


def pixel_norm_ref(x):
    return x * jax.lax.rsqrt(jnp.mean(x * x, axis=1, keepdims=True) + 1e-8)


if __name__ == "__main__":
    key = jax.random.PRNGKey(0)
    k_x, k_w, k_b, k_x2, k_w2, k_b2, k_p = jax.random.split(key, 7)

    # Encoder layer 1: ConvLayer(3, C, 1) (layer 0 is nn.Identity) -> VPU path.
    N, C_in, H, W = 2, 3, 16, 16
    C_out = 32
    x = jax.random.normal(k_x, (N, C_in, H, W), dtype=jnp.float32)
    weight = jax.random.normal(k_w, (C_out, C_in, 1, 1), dtype=jnp.float32)
    bias = 0.1 * jax.random.normal(k_b, (C_out,), dtype=jnp.float32)

    y = jax.block_until_ready(equal_conv1x1_fused_lrelu(x, weight, bias))
    y_ref = conv1x1_fused_lrelu_ref(x, weight, bias)
    assert y.shape == (N, C_out, H, W) and y.dtype == x.dtype
    assert jnp.allclose(y, y_ref, atol=1e-5, rtol=1e-5), "conv1x1+FusedLeakyReLU (VPU) mismatch"

    # Wide-channel 1x1 (ResBlock-skip-style shape) -> MXU path.
    C_in2, C_out2 = 32, 64
    x2 = jax.random.normal(k_x2, (N, C_in2, H, W), dtype=jnp.float32)
    weight2 = jax.random.normal(k_w2, (C_out2, C_in2, 1, 1), dtype=jnp.float32)
    bias2 = 0.1 * jax.random.normal(k_b2, (C_out2,), dtype=jnp.float32)

    y2 = jax.block_until_ready(equal_conv1x1_fused_lrelu(x2, weight2, bias2))
    y2_ref = conv1x1_fused_lrelu_ref(x2, weight2, bias2)
    assert y2.shape == (N, C_out2, H, W) and y2.dtype == x2.dtype
    assert jnp.allclose(y2, y2_ref, atol=1e-4, rtol=1e-4), "conv1x1+FusedLeakyReLU (MXU) mismatch"

    # PixelNorm utility from the same stylegan_networks.py.
    xp = jax.random.normal(k_p, (2, 4, 16, 16), dtype=jnp.float32)
    out = jax.block_until_ready(pixel_norm(xp))
    ref = pixel_norm_ref(xp)
    assert out.shape == xp.shape and out.dtype == xp.dtype
    assert jnp.allclose(out, ref, atol=1e-5, rtol=1e-5), "PixelNorm mismatch"

    print("KERNEL_OK")
</pallas_src>

<mosaic_0001>
module attributes {stable_mosaic.version = 11 : i64} {
  func.func @_conv1x1_flrelu_kernel(%arg0: i32, %arg1: i32, %arg2: memref<1x3x128xf32, #tpu.memory_space<vmem>>, %arg3: memref<32x3xf32, #tpu.memory_space<vmem>>, %arg4: memref<32x1xf32, #tpu.memory_space<vmem>>, %arg5: memref<1x32x128xf32, #tpu.memory_space<vmem>>) attributes {dimension_semantics = [#tpu.dimension_semantics<parallel>, #tpu.dimension_semantics<parallel>], iteration_bounds = array<i64: 2, 2>, scalar_prefetch = 0 : i64, scratch_operands = 0 : i64, tpu.core_type = #tpu.core_type<tc>, window_params = [{transform_indices = @transform_0, window_bounds = array<i64: 1, 3, 128>}, {pipeline_mode = #tpu.pipeline_mode<synchronous>, transform_indices = @transform_1, window_bounds = array<i64: 32, 3>}, {pipeline_mode = #tpu.pipeline_mode<synchronous>, transform_indices = @transform_2, window_bounds = array<i64: 32, 1>}, {transform_indices = @transform_3, window_bounds = array<i64: 1, 32, 128>}]} {
    %c0 = arith.constant 0 : index
    %c0_0 = arith.constant 0 : index
    %c0_1 = arith.constant 0 : index
    %0 = vector.load %arg2[%c0, %c0_0, %c0_1] : memref<1x3x128xf32, #tpu.memory_space<vmem>>, vector<1x3x128xf32>
    %1 = vector.shape_cast %0 : vector<1x3x128xf32> to vector<3x128xf32>
    %c0_2 = arith.constant 0 : index
    %c0_3 = arith.constant 0 : index
    %2 = vector.load %arg3[%c0_2, %c0_3] : memref<32x3xf32, #tpu.memory_space<vmem>>, vector<32x3xf32>
    %cst = arith.constant 0.577350259 : f32
    %3 = vector.broadcast %cst : f32 to vector<32x3xf32>
    %4 = arith.mulf %2, %3 : vector<32x3xf32>
    %c0_4 = arith.constant 0 : index
    %c0_5 = arith.constant 0 : index
    %5 = vector.load %arg4[%c0_4, %c0_5] : memref<32x1xf32, #tpu.memory_space<vmem>>, vector<32x1xf32>
    %6 = vector.extract_strided_slice %4 {offsets = [0, 0], sizes = [32, 1], strides = [1, 1]} : vector<32x3xf32> to vector<32x1xf32>
    %7 = vector.extract_strided_slice %1 {offsets = [0, 0], sizes = [1, 128], strides = [1, 1]} : vector<3x128xf32> to vector<1x128xf32>
    %8 = vector.broadcast %6 : vector<32x1xf32> to vector<32x128xf32>
    %9 = vector.broadcast %7 : vector<1x128xf32> to vector<32x128xf32>
    %10 = arith.mulf %8, %9 : vector<32x128xf32>
    %11 = vector.extract_strided_slice %4 {offsets = [0, 1], sizes = [32, 1], strides = [1, 1]} : vector<32x3xf32> to vector<32x1xf32>
    %12 = vector.extract_strided_slice %1 {offsets = [1, 0], sizes = [1, 128], strides = [1, 1]} : vector<3x128xf32> to vector<1x128xf32>
    %13 = vector.broadcast %11 : vector<32x1xf32> to vector<32x128xf32>
    %14 = vector.broadcast %12 : vector<1x128xf32> to vector<32x128xf32>
    %15 = arith.mulf %13, %14 : vector<32x128xf32>
    %16 = arith.addf %10, %15 : vector<32x128xf32>
    %17 = vector.extract_strided_slice %4 {offsets = [0, 2], sizes = [32, 1], strides = [1, 1]} : vector<32x3xf32> to vector<32x1xf32>
    %18 = vector.extract_strided_slice %1 {offsets = [2, 0], sizes = [1, 128], strides = [1, 1]} : vector<3x128xf32> to vector<1x128xf32>
    %19 = vector.broadcast %17 : vector<32x1xf32> to vector<32x128xf32>
    %20 = vector.broadcast %18 : vector<1x128xf32> to vector<32x128xf32>
    %21 = arith.mulf %19, %20 : vector<32x128xf32>
    %22 = arith.addf %16, %21 : vector<32x128xf32>
    %23 = vector.broadcast %5 : vector<32x1xf32> to vector<32x128xf32>
    %24 = arith.addf %22, %23 : vector<32x128xf32>
    %cst_6 = arith.constant 0.000000e+00 : f32
    %25 = vector.broadcast %cst_6 : f32 to vector<32x128xf32>
    %26 = arith.cmpf oge, %24, %25 : vector<32x128xf32>
    %cst_7 = arith.constant 1.41421354 : f32
    %cst_8 = arith.constant 0.282842726 : f32
    %27 = vector.broadcast %cst_7 : f32 to vector<32x128xf32>
    %28 = vector.broadcast %cst_8 : f32 to vector<32x128xf32>
    %29 = arith.select %26, %27, %28 : vector<32x128xi1>, vector<32x128xf32>
    %30 = arith.mulf %24, %29 : vector<32x128xf32>
    %31 = vector.shape_cast %30 : vector<32x128xf32> to vector<1x32x128xf32>
    %c0_9 = arith.constant 0 : index
    %c0_10 = arith.constant 0 : index
    %c0_11 = arith.constant 0 : index
    %32 = vector.load %arg5[%c0_9, %c0_10, %c0_11] : memref<1x32x128xf32, #tpu.memory_space<vmem>>, vector<1x32x128xf32>
    tpu.vector_store %arg5[%c0_9, %c0_10, %c0_11], %31 {strides = array<i32>} : memref<1x32x128xf32, #tpu.memory_space<vmem>>, vector<1x32x128xf32>,
    return
  }
  func.func @transform_0(%arg0: i32, %arg1: i32) -> (i32, i32, i32) {
    %c0_i32 = arith.constant 0 : i32
    %c0_i32_0 = arith.constant 0 : i32
    return %arg0, %c0_i32, %arg1 : i32, i32, i32
  }
  func.func @transform_1(%arg0: i32, %arg1: i32) -> (i32, i32) {
    %c0_i32 = arith.constant 0 : i32
    %c0_i32_0 = arith.constant 0 : i32
    %c0_i32_1 = arith.constant 0 : i32
    return %c0_i32, %c0_i32_0 : i32, i32
  }
  func.func @transform_2(%arg0: i32, %arg1: i32) -> (i32, i32) {
    %c0_i32 = arith.constant 0 : i32
    %c0_i32_0 = arith.constant 0 : i32
    %c0_i32_1 = arith.constant 0 : i32
    return %c0_i32, %c0_i32_0 : i32, i32
  }
  func.func @transform_3(%arg0: i32, %arg1: i32) -> (i32, i32, i32) {
    %c0_i32 = arith.constant 0 : i32
    %c0_i32_0 = arith.constant 0 : i32
    return %arg0, %c0_i32, %arg1 : i32, i32, i32
  }
}

</mosaic_0001>

<llo_original>
// kernel: tpu_custom_call.1
$region0: #{tpu_custom_call.1}
  #allocation0 [shape = 'u32[]', space=smem, size = 0x4, offset = 0x4, fixed_abs, tag = 'smem constant byte address 0x4 - core index']
  #allocation1 [shape = 'u32[144,128]{1,0:T(1,128)}', space=vmem, size = 0x12000, scoped, tag = 'internal scratch']
  %s0 = inlined_call_operand.vmem [shape: f32[2,3,256], index: 0, kind: input, shape index: {}]
  %s1 = inlined_call_operand.vmem [shape: f32[32,3], index: 1, kind: input, shape index: {}]
  %s2 = inlined_call_operand.vmem [shape: f32[32,1], index: 2, kind: input, shape index: {}]
  %s3 = inlined_call_operand.hbm [shape: f32[2,32,256], index: 3, kind: output, shape index: {}]
  %s4 = sld [smem:[#allocation0]]
  $region45: #{tpu_custom_call.1} parent=0
    _
  %s6 = ssub.s32 1, %s4
  %s7 = scalar_select 0, %s6, %s4
  $region1: #{tpu_custom_call.1} parent=0
    #allocation2 [shape = 'u8[32768]{0}', space=vmem, size = 0x8000, scoped, tag = 'output window, operand 0']
    #allocation3 [shape = 's32[2]{0}', space=sflag, size = 0x8, scoped, tag = 'scoped memory for tpu_custom_call.1']
    %8 = vsyncpa [#allocation3], 0
    %s9 = scalar_lea.sflag [#allocation3], 1
    %10 = vsyncpa %s9, 0
    loop: start=0, step=1, limit=6
    $region2: #{tpu_custom_call.1} parent=1 // loop_pre_header
      _
    $region3: #{tpu_custom_call.1} parent=1 // loop_header
      %s12 = sphi 0, %s16
      %p13 = scmp.ge.s32.totalorder %s12, 6
      %s19 = sphi 0, %s31
      %s20 = sphi 0, %s27
      %s21 = sphi 0, %s19
      %s22 = sphi 0, %s20
      %s23 = sphi 0, %s21
      %s24 = sphi 0, %s22
      %s36 = sphi 0, %s38
      %s39 = sphi 0, %s36
      %s40 = sphi 0, %s39
      %s56 = sphi 0, %s40
      %s60 = sphi 0, %s60
      %s62 = sphi 0, %s60
      %s63 = sphi 0, %s62
      %s77 = sphi 0, %s63
      %s81 = sphi 0, %s81
      %s83 = sphi 0, %s81
      %s84 = sphi 0, %s83
      %s98 = sphi 0, %s84
      %s106 = sphi 0, %s108
      %s109 = sphi 0, %s106
      %s110 = sphi 0, %s109
      %s126 = sphi 0, %s110
    $region4: #{tpu_custom_call.1} parent=1 // loop_header_branch
      %15 = sbr.rel (%p13) target = $region8
    $region5: #{tpu_custom_call.1} parent=1 // loop_body
      %s17 = ssub.s32 %s12, 1
      %s18 = ssub.s32 %s12, 2
      %s25 = sadd.s32 1, %s20
      %p26 = scmp.ge.s32.totalorder %s25, 2
      %s27 = scalar_select %p26, 0, %s25
      %s28 = sadd.s32 1, %s19
      %s29 = scalar_select %p26, %s28, %s19
      %p30 = scmp.ge.s32.totalorder %s29, 2
      %s31 = scalar_select %p30, 0, %s29
      %s32 = ssub.s32 %s19, %s31
      %s33 = ssub.s32 %s20, %s27
      %s34 = sor.u32 %s32, %s33
      %p35 = scmp.eq.s32.totalorder %s34, 0
      %s37 = sadd.s32 %s36, 1
      %s38 = scalar_select %p35, %s36, %s37
      %p41 = pneg %p35
      %p42 = scmp.eq.s32.totalorder %s12, 3
      %p43 = por %p41, %p42
      %p44 = scmp.ne.s32.totalorder %s36, %s39
      %p45 = scmp.eq.s32.totalorder %s12, 0
      %p46 = por %p44, %p45
      %p47 = scmp.ne.s32.totalorder %s36, %s39
      %p48 = scmp.eq.s32.totalorder %s17, 3
      %p49 = por %p47, %p48
      %p50 = scmp.ne.s32.totalorder %s39, %s40
      %p51 = scmp.eq.s32.totalorder %s17, 0
      %p52 = por %p50, %p51
      %p53 = scmp.ne.s32.totalorder %s39, %s40
      %p54 = scmp.eq.s32.totalorder %s18, 3
      %p55 = por %p53, %p54
      %p57 = scmp.ne.s32.totalorder %s40, %s56
      %p58 = scmp.eq.s32.totalorder %s18, 0
      %p59 = por %p57, %p58
      %s61 = sadd.s32 %s60, 1
      %p64 = scmp.eq.s32.totalorder %s12, 3
      %p65 = scmp.ne.s32.totalorder %s60, %s62
      %p66 = scmp.eq.s32.totalorder %s12, 0
      %p67 = por %p65, %p66
      %p68 = scmp.ne.s32.totalorder %s60, %s62
      %p69 = scmp.eq.s32.totalorder %s17, 3
      %p70 = por %p68, %p69
      %p71 = scmp.ne.s32.totalorder %s62, %s63
      %p72 = scmp.eq.s32.totalorder %s17, 0
      %p73 = por %p71, %p72
      %p74 = scmp.ne.s32.totalorder %s62, %s63
      %p75 = scmp.eq.s32.totalorder %s18, 3
      %p76 = por %p74, %p75
      %p78 = scmp.ne.s32.totalorder %s63, %s77
      %p79 = scmp.eq.s32.totalorder %s18, 0
      %p80 = por %p78, %p79
      %s82 = sadd.s32 %s81, 1
      %p85 = scmp.eq.s32.totalorder %s12, 3
      %p86 = scmp.ne.s32.totalorder %s81, %s83
      %p87 = scmp.eq.s32.totalorder %s12, 0
      %p88 = por %p86, %p87
      %p89 = scmp.ne.s32.totalorder %s81, %s83
      %p90 = scmp.eq.s32.totalorder %s17, 3
      %p91 = por %p89, %p90
      %p92 = scmp.ne.s32.totalorder %s83, %s84
      %p93 = scmp.eq.s32.totalorder %s17, 0
      %p94 = por %p92, %p93
      %p95 = scmp.ne.s32.totalorder %s83, %s84
      %p96 = scmp.eq.s32.totalorder %s18, 3
      %p97 = por %p95, %p96
      %p99 = scmp.ne.s32.totalorder %s84, %s98
      %p100 = scmp.eq.s32.totalorder %s18, 0
      %p101 = por %p99, %p100
      %s102 = ssub.s32 %s19, %s31
      %s103 = ssub.s32 %s20, %s27
      %s104 = sor.u32 %s102, %s103
      %p105 = scmp.eq.s32.totalorder %s104, 0
      %s107 = sadd.s32 %s106, 1
      %s108 = scalar_select %p105, %s106, %s107
      %p111 = pneg %p105
      %p112 = scmp.eq.s32.totalorder %s12, 3
      %p113 = por %p111, %p112
      %p114 = scmp.ne.s32.totalorder %s106, %s109
      %p115 = scmp.eq.s32.totalorder %s12, 0
      %p116 = por %p114, %p115
      %p117 = scmp.ne.s32.totalorder %s106, %s109
      %p118 = scmp.eq.s32.totalorder %s17, 3
      %p119 = por %p117, %p118
      %p120 = scmp.ne.s32.totalorder %s109, %s110
      %p121 = scmp.eq.s32.totalorder %s17, 0
      %p122 = por %p120, %p121
      %p123 = scmp.ne.s32.totalorder %s109, %s110
      %p124 = scmp.eq.s32.totalorder %s18, 3
      %p125 = por %p123, %p124
      %p127 = scmp.ne.s32.totalorder %s110, %s126
      %p128 = scmp.eq.s32.totalorder %s18, 0
      %p129 = por %p127, %p128
      %p130 = scmp.le.s32.totalorder 1, %s12
      %p131 = scmp.lt.s32.totalorder %s12, 5
      %p132 = pnand %p130, %p131
      %p133 = pneg %p132
      // Predicated region
      $region9: #{tpu_custom_call.1} parent=5 // pred_check
        _
      $region10: #{tpu_custom_call.1} parent=5 // pred_check_branch
        %135 = sbr.rel (%p132) target = $region12
      $region11: #{tpu_custom_call.1} parent=5 // pred_region
        %s136 = ssub.s32 %s12, 1
        // Predicated region
        $region13: #{tpu_custom_call.1} parent=11 // pred_check
          %p137 = pneg %p73
        $region14: #{tpu_custom_call.1} parent=11 // pred_check_branch
          %139 = sbr.rel (%p137) target = $region16
        $region15: #{tpu_custom_call.1} parent=11 // pred_region
          _
        $region16: #{tpu_custom_call.1} parent=11 // pred_fallthru
          _
        // Predicated region
        $region17: #{tpu_custom_call.1} parent=11 // pred_check
          %p140 = pneg %p94
        $region18: #{tpu_custom_call.1} parent=11 // pred_check_branch
          %142 = sbr.rel (%p140) target = $region20
        $region19: #{tpu_custom_call.1} parent=11 // pred_region
          _
        $region20: #{tpu_custom_call.1} parent=11 // pred_fallthru
          _
      $region12: #{tpu_custom_call.1} parent=5 // pred_fallthru
        _
      %p143 = scmp.lt.s32.totalorder %s12, 4
      // Predicated region
      $region21: #{tpu_custom_call.1} parent=5 // pred_check
        %p144 = pneg %p143
      $region22: #{tpu_custom_call.1} parent=5 // pred_check_branch
        %146 = sbr.rel (%p144) target = $region24
      $region23: #{tpu_custom_call.1} parent=5 // pred_region
        // Predicated region
        $region25: #{tpu_custom_call.1} parent=23 // pred_check
          %p147 = pneg %p46
        $region26: #{tpu_custom_call.1} parent=23 // pred_check_branch
          %149 = sbr.rel (%p147) target = $region28
        $region27: #{tpu_custom_call.1} parent=23 // pred_region
          %p150 = scmp.lt.s32.totalorder %s19, 1
          %s151 = scalar_select %p150, %s19, 1
          %p152 = scmp.lt.s32.totalorder %s20, 1
          %s153 = scalar_select %p152, %s20, 1
          %s154 = smul.addr %s151, 2
          %s155 = sadd.s32 %s153, %s154
          %s156 = smul.addr %s155, 4
          %s157 = scalar_lea.vmem %s0, %s156
        $region28: #{tpu_custom_call.1} parent=23 // pred_fallthru
          _
      $region24: #{tpu_custom_call.1} parent=5 // pred_fallthru
        _
      %p158 = scmp.le.s32.totalorder 1, %s12
      %p159 = scmp.lt.s32.totalorder %s12, 5
      %p160 = pnand %p158, %p159
      %p161 = pneg %p160
      // Predicated region
      $region29: #{tpu_custom_call.1} parent=5 // pred_check
        _
      $region30: #{tpu_custom_call.1} parent=5 // pred_check_branch
        %163 = sbr.rel (%p160) target = $region32
      $region31: #{tpu_custom_call.1} parent=5 // pred_region
        %s164 = ssub.s32 %s12, 1
        %p165 = scmp.lt.s32.totalorder %s21, 1
        %s166 = scalar_select %p165, %s21, 1
        %p167 = scmp.lt.s32.totalorder %s22, 1
        %s168 = scalar_select %p167, %s22, 1
        %s169 = smul.addr %s166, 2
        %s170 = sadd.s32 %s168, %s169
        %s171 = smul.addr %s170, 4
        %s172 = scalar_lea.vmem %s0, %s171
        %p173 = pneg %p52
        %p174 = pneg %p49
        %p175 = pneg %p73
        %p176 = pneg %p70
        %p177 = pneg %p94
        %p178 = pneg %p91
        %p179 = pneg %p122
        %p180 = pneg %p119
        %s181 = sand.u32 %s109, 1
        %s182 = scalar_lea.sflag [#allocation3], %s181
        %s183 = sand.u32 %s109, 1
        %s184 = smul.addr %s183, 32
        %s185 = scalar_lea.vmem [#allocation2], %s184
        %p186 = scmp.lt.s32.totalorder %s21, 1
        %s187 = scalar_select %p186, %s21, 1
        %p188 = scmp.lt.s32.totalorder %s22, 1
        %s189 = scalar_select %p188, %s22, 1
        %s190 = smul.addr %s187, 2
        %s191 = sadd.s32 %s189, %s190
        %s192 = smul.addr %s191, 4
        %s193 = scalar_lea.vmem %s0, %s192
        %v194 = vld [vmem:[%s193] sm:$0x7]
        %v195 = vld [vmem:[%s1] sm:$0xff]
        %v196 = vld [vmem:[%s1 + $0x8] sm:$0xff]
        %v197 = vld [vmem:[%s1 + $0x10] sm:$0xff]
        %v198 = vld [vmem:[%s1 + $0x18] sm:$0xff]
        %v199 = vmul.f32 %v195, 0.57735026
        %v200 = vmul.f32 %v196, 0.57735026
        %v201 = vmul.f32 %v197, 0.57735026
        %v202 = vmul.f32 %v198, 0.57735026
        %v203 = vld [vmem:[%s2] sm:$0xff]
        %v204 = vld [vmem:[%s2 + $0x8] sm:$0xff]
        %v205 = vld [vmem:[%s2 + $0x10] sm:$0xff]
        %v206 = vld [vmem:[%s2 + $0x18] sm:$0xff]
        %208 = vset.pattern.permute.xlu0 0
        %209 = vperm.xlu0 %208, %v199
        %v210 = vpop.permute.xlu0 %209
        %213 = vset.pattern.permute.xlu0 0
        %214 = vperm.xlu0 %213, %v200
        %v215 = vpop.permute.xlu0 %214
        %218 = vset.pattern.permute.xlu0 0
        %219 = vperm.xlu0 %218, %v201
        %v220 = vpop.permute.xlu0 %219
        %223 = vset.pattern.permute.xlu0 0
        %224 = vperm.xlu0 %223, %v202
        %v225 = vpop.permute.xlu0 %224
        %v227 = vlaneseq
        %v228 = vshrl.u32 %v227, 7
        %v229 = vsub.s32 0, %v228
        %v230 = vrot.slane %v194, %v229
        %v231 = vmul.f32 %v210, %v230
        %v232 = vmul.f32 %v215, %v230
        %v233 = vmul.f32 %v220, %v230
        %v234 = vmul.f32 %v225, %v230
        %235 = vset.pattern.permute.xlu0 1
        %236 = vperm.xlu0 %235, %v199
        %v237 = vpop.permute.xlu0 %236
        %239 = vset.pattern.permute.xlu0 1
        %240 = vperm.xlu0 %239, %v200
        %v241 = vpop.permute.xlu0 %240
        %243 = vset.pattern.permute.xlu0 1
        %244 = vperm.xlu0 %243, %v201
        %v245 = vpop.permute.xlu0 %244
        %247 = vset.pattern.permute.xlu0 1
        %248 = vperm.xlu0 %247, %v202
        %v249 = vpop.permute.xlu0 %248
        %v251 = vlaneseq
        %v252 = vshrl.u32 %v251, 7
        %v253 = vsub.s32 1, %v252
        %v254 = vrot.slane %v194, %v253
        %v255 = vmul.f32 %v237, %v254
        %v256 = vmul.f32 %v241, %v254
        %v257 = vmul.f32 %v245, %v254
        %v258 = vmul.f32 %v249, %v254
        %v259 = vadd.f32 %v231, %v255
        %v260 = vadd.f32 %v232, %v256
        %v261 = vadd.f32 %v233, %v257
        %v262 = vadd.f32 %v234, %v258
        %263 = vset.pattern.permute.xlu0 2
        %264 = vperm.xlu0 %263, %v199
        %v265 = vpop.permute.xlu0 %264
        %267 = vset.pattern.permute.xlu0 2
        %268 = vperm.xlu0 %267, %v200
        %v269 = vpop.permute.xlu0 %268
        %271 = vset.pattern.permute.xlu0 2
        %272 = vperm.xlu0 %271, %v201
        %v273 = vpop.permute.xlu0 %272
        %275 = vset.pattern.permute.xlu0 2
        %276 = vperm.xlu0 %275, %v202
        %v277 = vpop.permute.xlu0 %276
        %v279 = vlaneseq
        %v280 = vshrl.u32 %v279, 7
        %v281 = vsub.s32 2, %v280
        %v282 = vrot.slane %v194, %v281
        %v283 = vmul.f32 %v265, %v282
        %v284 = vmul.f32 %v269, %v282
        %v285 = vmul.f32 %v273, %v282
        %v286 = vmul.f32 %v277, %v282
        %v287 = vadd.f32 %v259, %v283
        %v288 = vadd.f32 %v260, %v284
        %v289 = vadd.f32 %v261, %v285
        %v290 = vadd.f32 %v262, %v286
        %292 = vset.pattern.permute.xlu0 0
        %293 = vperm.xlu0 %292, %v203
        %v294 = vpop.permute.xlu0 %293
        %297 = vset.pattern.permute.xlu0 0
        %298 = vperm.xlu0 %297, %v204
        %v299 = vpop.permute.xlu0 %298
        %302 = vset.pattern.permute.xlu0 0
        %303 = vperm.xlu0 %302, %v205
        %v304 = vpop.permute.xlu0 %303
        %307 = vset.pattern.permute.xlu0 0
        %308 = vperm.xlu0 %307, %v206
        %v309 = vpop.permute.xlu0 %308
        %v311 = vadd.f32 %v287, %v294
        %v312 = vadd.f32 %v288, %v299
        %v313 = vadd.f32 %v289, %v304
        %v314 = vadd.f32 %v290, %v309
        %vm315 = vcmp.ge.f32.partialorder %v311, 0.0
        %vm316 = vcmp.ge.f32.partialorder %v312, 0.0
        %vm317 = vcmp.ge.f32.partialorder %v313, 0.0
        %vm318 = vcmp.ge.f32.partialorder %v314, 0.0
        %v319 = vsel %vm315, 1.4142135, 0.28284273
        %v320 = vsel %vm316, 1.4142135, 0.28284273
        %v321 = vsel %vm317, 1.4142135, 0.28284273
        %v322 = vsel %vm318, 1.4142135, 0.28284273
        %v323 = vmul.f32 %v311, %v319
        %v324 = vmul.f32 %v312, %v320
        %v325 = vmul.f32 %v313, %v321
        %v326 = vmul.f32 %v314, %v322
        %327 = vst [vmem:[%s185] sm:$0xff] %v323
        %328 = vst [vmem:[%s185 + $0x8] sm:$0xff] %v324
        %329 = vst [vmem:[%s185 + $0x10] sm:$0xff] %v325
        %330 = vst [vmem:[%s185 + $0x18] sm:$0xff] %v326
        %s331 = sand.u32 %s109, 1
        %s332 = scalar_lea.sflag [#allocation3], %s331
        %s333 = sand.u32 %s109, 1
        %s334 = smul.addr %s333, 32
        %s335 = scalar_lea.vmem [#allocation2], %s334
        // Predicated region
        $region33: #{tpu_custom_call.1} parent=31 // pred_check
          %p336 = pneg %p119
        $region34: #{tpu_custom_call.1} parent=31 // pred_check_branch
          %338 = sbr.rel (%p336) target = $region36
        $region35: #{tpu_custom_call.1} parent=31 // pred_region
          %s340 = ssub.s32 512, 512
          %341 = vsyncadd %s332, %s340
          %s342 = smul.addr %s21, 8
          %s343 = sadd.s32 %s22, %s342
          %s344 = smul.addr %s343, 128
          %s345 = scalar_lea.hbm %s3, %s344
          %s346 = sshll.u32 %s335, 4
          %s347 = int_to_ptr.vmem [resolvable:$true] %s346
          %352 = dma.vmem_to_hbm [thread:$0]  %s347, 512, %s345, %s332, 128, 256, 8
        $region36: #{tpu_custom_call.1} parent=31 // pred_fallthru
          _
      $region32: #{tpu_custom_call.1} parent=5 // pred_fallthru
        _
      %p353 = scmp.le.s32.totalorder 2, %s12
      // Predicated region
      $region37: #{tpu_custom_call.1} parent=5 // pred_check
        %p354 = pneg %p353
      $region38: #{tpu_custom_call.1} parent=5 // pred_check_branch
        %356 = sbr.rel (%p354) target = $region40
      $region39: #{tpu_custom_call.1} parent=5 // pred_region
        %s357 = ssub.s32 %s12, 2
        // Predicated region
        $region41: #{tpu_custom_call.1} parent=39 // pred_check
          %p358 = pneg %p125
        $region42: #{tpu_custom_call.1} parent=39 // pred_check_branch
          %360 = sbr.rel (%p358) target = $region44
        $region43: #{tpu_custom_call.1} parent=39 // pred_region
          %s361 = sand.u32 %s110, 1
          %s362 = scalar_lea.sflag [#allocation3], %s361
          %s363 = sand.u32 %s110, 1
          %s364 = smul.addr %s363, 32
          %s365 = scalar_lea.vmem [#allocation2], %s364
          %366 = dma.done %s362, 512
        $region44: #{tpu_custom_call.1} parent=39 // pred_fallthru
          _
      $region40: #{tpu_custom_call.1} parent=5 // pred_fallthru
        _
    $region6: #{tpu_custom_call.1} parent=1 // loop_footer
      %s16 = sadd.s32 1, %s12
    $region7: #{tpu_custom_call.1} parent=1 // loop_footer_branch
      %11 = sbr.rel target = $region3
    $region8: #{tpu_custom_call.1} parent=1 // loop_exit
      _
    %367 = vsyncpa [#allocation3], 1
    %s368 = scalar_lea.sflag [#allocation3], 1
    %369 = vsyncpa %s368, 1

</llo_original>
